<compile_context>
chip_gen: v6e
topology: v6e:2x2x1
jax: 0.10.0
libtpu: 0.0.40
codegen_flags: <defaults>
</compile_context>

<pallas_src>
import jax
import jax.numpy as jnp
from jax.experimental import pallas as pl
from jax.experimental.pallas import tpu as pltpu

D_EMB = 256          # per-sub-model embedding width (concat -> 512)
D_HID = 256          # classifier hidden width


def interaction_kernel(tcr_ref, ant_ref,
                       w_tcr_ref, w_ant_ref, b1_ref,
                       w2_row_ref, b2_ref,
                       out_ref):
    # Input blocks: (TB, L*Din), already mean/encoder/classifier-folded into the weights.
    # bf16 x bf16 -> f32 accumulation on the MXU.
    h = (jnp.dot(tcr_ref[...], w_tcr_ref[...], preferred_element_type=jnp.float32)
         + jnp.dot(ant_ref[...], w_ant_ref[...], preferred_element_type=jnp.float32)
         + b1_ref[...])                                           # (TB, 256) f32
    h = jnp.maximum(h, 0.0)                                       # ReLU

    # Linear(256, 1): VPU multiply + lane reduction instead of an N=1 MXU matmul.
    logits = jnp.sum(h * w2_row_ref[...], axis=-1) + b2_ref[0, 0]  # (TB,)

    # Lane-dense store: batch along the lane axis.
    out_ref[...] = jax.nn.sigmoid(logits)[None, :]                 # (1, TB)


def fuse_params(p, seq_len, input_dtype=jnp.bfloat16):
    """Host-side one-time prep.

    Folds (a) the linear per-token encoders into the classifier's first Linear and
    (b) the mean over the sequence axis (tile by L, scale by 1/L) into pinned weights
    of shape (L*Din, 256), so the kernel is one matmul per side.
    Exact because the stand-in encoders are linear and there is no nonlinearity before
    the first classifier Linear.
    """
    w1_t = p["w1"][:D_EMB, :]                       # multiplies the tcr half of the concat
    w1_a = p["w1"][D_EMB:, :]                       # multiplies the antigen half
    w_tcr_f = p["w_tcr"] @ w1_t                     # (Din, 256)
    w_ant_f = p["w_ant"] @ w1_a                     # (Din, 256)
    inv_l = 1.0 / seq_len
    return {
        "w_tcr_pool": (jnp.tile(w_tcr_f, (seq_len, 1)) * inv_l).astype(input_dtype),  # (L*Din, 256)
        "w_ant_pool": (jnp.tile(w_ant_f, (seq_len, 1)) * inv_l).astype(input_dtype),  # (L*Din, 256)
        "b1_f":   (p["b_tcr"] @ w1_t + p["b_ant"] @ w1_a + p["b1"]).astype(jnp.float32),  # (1, 256)
        "w2_row": p["w2"].T.astype(jnp.float32),                                           # (1, 256)
        "b2":     p["b2"].astype(jnp.float32),                                             # (1, 1)
    }


def _choose_tile_and_pad(b, row_bytes):
    """Pick batch tile TB and the padded batch size.

    TB = largest multiple of 128 such that 2 inputs x 2 pipeline buffers of (TB, L*Din)
    fit an ~8 MiB budget (safe under v5e's 16 MiB scoped default and v7x's 64 MiB
    physical VMEM), capped at 1024 and backed off so the grid keeps >= 4 steps for
    pipelining / megacore sharding.
    """
    if b <= 128:
        return b, b                                   # single full-extent block
    budget = 8 * 1024 * 1024
    tb = (budget // (4 * row_bytes)) // 128 * 128
    tb = int(min(max(tb, 128), 1024))
    while tb > 128 and -(-b // tb) < 4:
        tb -= 128
    b_pad = -(-b // tb) * tb
    return tb, b_pad


def interaction_forward(tcr_seq, antigen_seq, fused, *, input_dtype=jnp.bfloat16):
    B, L, Din = tcr_seq.shape
    K = L * Din

    # Lane-dense sequence layout: (B, L*Din) with the 256-wide axis minor; bf16 in HBM.
    tcr_flat = tcr_seq.reshape(B, K).astype(input_dtype)
    ant_flat = antigen_seq.reshape(B, K).astype(input_dtype)

    row_bytes = K * jnp.dtype(input_dtype).itemsize
    TB, B_pad = _choose_tile_and_pad(B, row_bytes)
    if B_pad != B:
        pad = ((0, B_pad - B), (0, 0))
        tcr_flat = jnp.pad(tcr_flat, pad)
        ant_flat = jnp.pad(ant_flat, pad)

    grid = (B_pad // TB,)
    seq_spec = pl.BlockSpec((TB, K), lambda i: (i, 0))
    pinned = lambda shape: pl.BlockSpec(shape, lambda i: (0, 0))

    out = pl.pallas_call(
        interaction_kernel,
        out_shape=jax.ShapeDtypeStruct((1, B_pad), jnp.float32),
        grid=grid,
        in_specs=[
            seq_spec,                                # tcr  (TB, L*Din)
            seq_spec,                                # ant  (TB, L*Din)
            pinned((K, D_HID)),                      # pooled+fused tcr weight (pinned)
            pinned((K, D_HID)),                      # pooled+fused ant weight (pinned)
            pinned((1, D_HID)),                      # fused bias
            pinned((1, D_HID)),                      # w2 as a row vector
            pl.BlockSpec(memory_space=pltpu.MemorySpace.SMEM),   # b2 scalar
        ],
        out_specs=pl.BlockSpec((1, TB), lambda i: (0, i)),
        compiler_params=pltpu.CompilerParams(
            dimension_semantics=("parallel",),       # batch grid -> both TCs on v7x
            vmem_limit_bytes=32 * 1024 * 1024,       # explicit: v5e default is only 16 MiB
        ),
    )(tcr_flat, ant_flat,
      fused["w_tcr_pool"], fused["w_ant_pool"], fused["b1_f"],
      fused["w2_row"], fused["b2"])

    # Drop batch padding; matches `.squeeze()` in the torch forward.
    return jnp.squeeze(out[:, :B])


def reference_forward(tcr_seq, antigen_seq, p):
    """Pure-JAX f32 reference mirroring the torch semantics (unfused, unpooled-weights)."""
    tcr_tok = tcr_seq @ p["w_tcr"] + p["b_tcr"][None]        # (B, L, 256)
    ant_tok = antigen_seq @ p["w_ant"] + p["b_ant"][None]    # (B, L, 256)
    tcr_emb = jnp.mean(tcr_tok, axis=1)
    ant_emb = jnp.mean(ant_tok, axis=1)
    combined = jnp.concatenate([tcr_emb, ant_emb], axis=1)   # (B, 512)
    h = jnp.maximum(combined @ p["w1"] + p["b1"][None], 0.0)
    return jnp.squeeze(jax.nn.sigmoid(h @ p["w2"] + p["b2"][None]))


def init_params(key, d_in):
    ks = jax.random.split(key, 8)
    s = 0.02
    return {
        "w_tcr": s * jax.random.normal(ks[0], (d_in, D_EMB), jnp.float32),
        "b_tcr": s * jax.random.normal(ks[1], (1, D_EMB), jnp.float32),
        "w_ant": s * jax.random.normal(ks[2], (d_in, D_EMB), jnp.float32),
        "b_ant": s * jax.random.normal(ks[3], (1, D_EMB), jnp.float32),
        "w1":    s * jax.random.normal(ks[4], (2 * D_EMB, D_HID), jnp.float32),
        "b1":    s * jax.random.normal(ks[5], (1, D_HID), jnp.float32),
        "w2":    s * jax.random.normal(ks[6], (D_HID, 1), jnp.float32),
        "b2":    s * jax.random.normal(ks[7], (1, 1), jnp.float32),
    }


if __name__ == "__main__":
    key = jax.random.PRNGKey(0)
    k_tcr, k_ant, k_param = jax.random.split(key, 3)

    B, L, D_IN = 8, 8, 32
    tcr_seq = jax.random.normal(k_tcr, (B, L, D_IN), jnp.float32)
    antigen_seq = jax.random.normal(k_ant, (B, L, D_IN), jnp.float32)
    params = init_params(k_param, D_IN)

    # One-time host-side prep: encoder + mean-pool folded into pinned bf16 weights.
    fused = fuse_params(params, L, input_dtype=jnp.bfloat16)

    out = jax.block_until_ready(
        interaction_forward(tcr_seq, antigen_seq, fused, input_dtype=jnp.bfloat16))
    ref = jax.block_until_ready(reference_forward(tcr_seq, antigen_seq, params))

    assert out.shape == (B,), out.shape
    # bf16 sequence storage / bf16 MXU inputs vs. pure-f32 reference -> modest tolerance.
    assert jnp.allclose(out, ref, atol=5e-3, rtol=5e-3), (out, ref)
    print("KERNEL_OK")
</pallas_src>

<mosaic_0001>
module attributes {stable_mosaic.version = 11 : i64} {
  func.func @interaction_kernel(%arg0: i32, %arg1: memref<8x256xbf16, #tpu.memory_space<vmem>>, %arg2: memref<8x256xbf16, #tpu.memory_space<vmem>>, %arg3: memref<256x256xbf16, #tpu.memory_space<vmem>>, %arg4: memref<256x256xbf16, #tpu.memory_space<vmem>>, %arg5: memref<1x256xf32, #tpu.memory_space<vmem>>, %arg6: memref<1x256xf32, #tpu.memory_space<vmem>>, %arg7: memref<1x1xf32, #tpu.memory_space<smem>>, %arg8: memref<1x8xf32, #tpu.memory_space<vmem>>) attributes {dimension_semantics = [#tpu.dimension_semantics<parallel>], iteration_bounds = array<i64: 1>, scalar_prefetch = 0 : i64, scratch_operands = 0 : i64, tpu.core_type = #tpu.core_type<tc>, window_params = [{transform_indices = @transform_0, window_bounds = array<i64: 8, 256>}, {transform_indices = @transform_1, window_bounds = array<i64: 8, 256>}, {pipeline_mode = #tpu.pipeline_mode<synchronous>, transform_indices = @transform_2, window_bounds = array<i64: 256, 256>}, {pipeline_mode = #tpu.pipeline_mode<synchronous>, transform_indices = @transform_3, window_bounds = array<i64: 256, 256>}, {pipeline_mode = #tpu.pipeline_mode<synchronous>, transform_indices = @transform_4, window_bounds = array<i64: 1, 256>}, {pipeline_mode = #tpu.pipeline_mode<synchronous>, transform_indices = @transform_5, window_bounds = array<i64: 1, 256>}, {transform_indices = @transform_6, window_bounds = array<i64: 1, 1>}, {transform_indices = @transform_7, window_bounds = array<i64: 1, 8>}]} {
    %c0 = arith.constant 0 : index
    %c0_0 = arith.constant 0 : index
    %0 = vector.load %arg1[%c0, %c0_0] : memref<8x256xbf16, #tpu.memory_space<vmem>>, vector<8x256xbf16>
    %c0_1 = arith.constant 0 : index
    %c0_2 = arith.constant 0 : index
    %1 = vector.load %arg3[%c0_1, %c0_2] : memref<256x256xbf16, #tpu.memory_space<vmem>>, vector<256x256xbf16>
    %cst = arith.constant dense<0.000000e+00> : vector<8x256xf32>
    %2 = tpu.matmul %0, %1, %cst {dimension_numbers = #tpu.dot_dimension_numbers<[1], [0], [0], [1], [0, 0, 1, 1], [], []>} : vector<8x256xbf16>, vector<256x256xbf16>, vector<8x256xf32> -> vector<8x256xf32>
    %c0_3 = arith.constant 0 : index
    %c0_4 = arith.constant 0 : index
    %3 = vector.load %arg2[%c0_3, %c0_4] : memref<8x256xbf16, #tpu.memory_space<vmem>>, vector<8x256xbf16>
    %c0_5 = arith.constant 0 : index
    %c0_6 = arith.constant 0 : index
    %4 = vector.load %arg4[%c0_5, %c0_6] : memref<256x256xbf16, #tpu.memory_space<vmem>>, vector<256x256xbf16>
    %cst_7 = arith.constant dense<0.000000e+00> : vector<8x256xf32>
    %5 = tpu.matmul %3, %4, %cst_7 {dimension_numbers = #tpu.dot_dimension_numbers<[1], [0], [0], [1], [0, 0, 1, 1], [], []>} : vector<8x256xbf16>, vector<256x256xbf16>, vector<8x256xf32> -> vector<8x256xf32>
    %6 = arith.addf %2, %5 : vector<8x256xf32>
    %c0_8 = arith.constant 0 : index
    %c0_9 = arith.constant 0 : index
    %7 = vector.load %arg5[%c0_8, %c0_9] : memref<1x256xf32, #tpu.memory_space<vmem>>, vector<1x256xf32>
    %8 = vector.broadcast %7 : vector<1x256xf32> to vector<8x256xf32>
    %9 = arith.addf %6, %8 : vector<8x256xf32>
    %cst_10 = arith.constant 0.000000e+00 : f32
    %10 = vector.broadcast %cst_10 : f32 to vector<8x256xf32>
    %11 = arith.maximumf %9, %10 : vector<8x256xf32>
    %c0_11 = arith.constant 0 : index
    %c0_12 = arith.constant 0 : index
    %12 = vector.load %arg6[%c0_11, %c0_12] : memref<1x256xf32, #tpu.memory_space<vmem>>, vector<1x256xf32>
    %13 = vector.broadcast %12 : vector<1x256xf32> to vector<8x256xf32>
    %14 = arith.mulf %11, %13 : vector<8x256xf32>
    %cst_13 = arith.constant dense<0.000000e+00> : vector<8xf32>
    %15 = vector.multi_reduction <add>, %14, %cst_13 [1] : vector<8x256xf32> to vector<8xf32>
    %c0_14 = arith.constant 0 : index
    %c0_15 = arith.constant 0 : index
    %16 = memref.load %arg7[%c0_14, %c0_15] : memref<1x1xf32, #tpu.memory_space<smem>>
    %17 = vector.broadcast %16 : f32 to vector<8xf32>
    %18 = arith.addf %15, %17 : vector<8xf32>
    %19 = arith.negf %18 : vector<8xf32>
    %20 = math.exp %19 : vector<8xf32>
    %cst_16 = arith.constant 1.000000e+00 : f32
    %21 = vector.broadcast %cst_16 : f32 to vector<8xf32>
    %22 = arith.addf %21, %20 : vector<8xf32>
    %23 = arith.divf %21, %22 : vector<8xf32>
    %24 = vector.shape_cast %23 : vector<8xf32> to vector<1x8xf32>
    %c0_17 = arith.constant 0 : index
    %c0_18 = arith.constant 0 : index
    %25 = vector.load %arg8[%c0_17, %c0_18] : memref<1x8xf32, #tpu.memory_space<vmem>>, vector<1x8xf32>
    tpu.vector_store %arg8[%c0_17, %c0_18], %24 {strides = array<i32>} : memref<1x8xf32, #tpu.memory_space<vmem>>, vector<1x8xf32>,
    return
  }
  func.func @transform_0(%arg0: i32) -> (i32, i32) {
    %c0_i32 = arith.constant 0 : i32
    %c0_i32_0 = arith.constant 0 : i32
    return %arg0, %c0_i32 : i32, i32
  }
  func.func @transform_1(%arg0: i32) -> (i32, i32) {
    %c0_i32 = arith.constant 0 : i32
    %c0_i32_0 = arith.constant 0 : i32
    return %arg0, %c0_i32 : i32, i32
  }
  func.func @transform_2(%arg0: i32) -> (i32, i32) {
    %c0_i32 = arith.constant 0 : i32
    %c0_i32_0 = arith.constant 0 : i32
    %c0_i32_1 = arith.constant 0 : i32
    return %c0_i32, %c0_i32_0 : i32, i32
  }
  func.func @transform_3(%arg0: i32) -> (i32, i32) {
    %c0_i32 = arith.constant 0 : i32
    %c0_i32_0 = arith.constant 0 : i32
    %c0_i32_1 = arith.constant 0 : i32
    return %c0_i32, %c0_i32_0 : i32, i32
  }
  func.func @transform_4(%arg0: i32) -> (i32, i32) {
    %c0_i32 = arith.constant 0 : i32
    %c0_i32_0 = arith.constant 0 : i32
    %c0_i32_1 = arith.constant 0 : i32
    return %c0_i32, %c0_i32_0 : i32, i32
  }
  func.func @transform_5(%arg0: i32) -> (i32, i32) {
    %c0_i32 = arith.constant 0 : i32
    %c0_i32_0 = arith.constant 0 : i32
    %c0_i32_1 = arith.constant 0 : i32
    return %c0_i32, %c0_i32_0 : i32, i32
  }
  func.func @transform_6(%arg0: i32) -> (i32, i32) {
    %c0_i32 = arith.constant 0 : i32
    %c0_i32_0 = arith.constant 0 : i32
    %c0_i32_1 = arith.constant 0 : i32
    return %c0_i32, %c0_i32_0 : i32, i32
  }
  func.func @transform_7(%arg0: i32) -> (i32, i32) {
    %c0_i32 = arith.constant 0 : i32
    %c0_i32_0 = arith.constant 0 : i32
    return %c0_i32, %arg0 : i32, i32
  }
}

</mosaic_0001>

<llo_original>
// kernel: tpu_custom_call.1
$region0: #{tpu_custom_call.1}
  #allocation0 [shape = 'u32[]', space=smem, size = 0x4, offset = 0x4, fixed_abs, tag = 'smem constant byte address 0x4 - core index']
  #allocation1 [shape = 'u32[144,128]{1,0:T(1,128)}', space=vmem, size = 0x12000, scoped, tag = 'internal scratch']
  #allocation2 [shape = 'f32[1,1]{1,0:T(1,128)S(6)}', space=smem, size = 0x200, scoped, tag = 'scoped memory for tpu_custom_call.1']
  %s0 = inlined_call_operand.hbm [shape: bf16[8,256], index: 0, kind: input, shape index: {}]
  %s1 = inlined_call_operand.hbm [shape: bf16[8,256], index: 1, kind: input, shape index: {}]
  %s2 = inlined_call_operand.hbm [shape: bf16[256,256], index: 2, kind: input, shape index: {}]
  %s3 = inlined_call_operand.hbm [shape: bf16[256,256], index: 3, kind: input, shape index: {}]
  %s4 = inlined_call_operand.vmem [shape: f32[1,256], index: 4, kind: input, shape index: {}]
  %s5 = inlined_call_operand.vmem [shape: f32[1,256], index: 5, kind: input, shape index: {}]
  %s6 = inlined_call_operand.<no memory space> [shape: f32[1,1], index: 6, kind: input, shape index: {}]
  %s7 = inlined_call_operand.hbm [shape: f32[1,8], index: 7, kind: output, shape index: {}]
  %s8 = sld [smem:[#allocation0]]
  $region54: #{tpu_custom_call.1} parent=0
    _
  %s10 = ssub.s32 1, %s8
  %s11 = scalar_select 0, %s10, %s8
  %12 = sst [smem:[#allocation2]] %s6
  $region1: #{tpu_custom_call.1} parent=0
    #allocation3 [shape = 'u8[4096]{0}', space=vmem, size = 0x1000, scoped, tag = 'input window, operand 0, single buffered']
    #allocation4 [shape = 's32[1]{0}', space=sflag, size = 0x4, scoped, tag = 'scoped memory for tpu_custom_call.1']
    #allocation5 [shape = 's32[1]{0}', space=sflag, size = 0x4, scoped, tag = 'scoped memory for tpu_custom_call.1']
    #allocation6 [shape = 'u8[4096]{0}', space=vmem, size = 0x1000, scoped, tag = 'input window, operand 1, single buffered']
    #allocation7 [shape = 's32[1]{0}', space=sflag, size = 0x4, scoped, tag = 'scoped memory for tpu_custom_call.1']
    #allocation8 [shape = 'u8[131072]{0}', space=vmem, size = 0x20000, scoped, tag = 'input window, operand 2, single buffered']
    #allocation9 [shape = 'u8[131072]{0}', space=vmem, size = 0x20000, scoped, tag = 'input window, operand 3, single buffered']
    #allocation10 [shape = 's32[1]{0}', space=sflag, size = 0x4, scoped, tag = 'scoped memory for tpu_custom_call.1']
    #allocation11 [shape = 'u8[512]{0}', space=vmem, size = 0x400, scoped, tag = 'output window, operand 0, single buffered']
    %13 = vsyncpa [#allocation4], 0
    %14 = vsyncpa [#allocation7], 0
    %15 = vsyncpa [#allocation10], 0
    %16 = vsyncpa [#allocation5], 0
    // Predicated region
    $region2: #{tpu_custom_call.1} parent=1 // pred_check
      _
    $region3: #{tpu_custom_call.1} parent=1 // pred_check_branch
      %18 = sbr.rel (0) target = $region5
    $region4: #{tpu_custom_call.1} parent=1 // pred_region
      %s20 = ssub.s32 128, 128
      %21 = vsyncadd [#allocation4], %s20
      %s23 = sshll.u32 [#allocation3], 4
      %s24 = int_to_ptr.vmem [resolvable:$true] %s23
      %26 = dma.hbm_to_vmem [thread:$0]  %s0, 128, %s24, [#allocation4]
    $region5: #{tpu_custom_call.1} parent=1 // pred_fallthru
      _
    // Predicated region
    $region6: #{tpu_custom_call.1} parent=1 // pred_check
      _
    $region7: #{tpu_custom_call.1} parent=1 // pred_check_branch
      %28 = sbr.rel (0) target = $region9
    $region8: #{tpu_custom_call.1} parent=1 // pred_region
      %s30 = ssub.s32 128, 128
      %31 = vsyncadd [#allocation7], %s30
      %s33 = sshll.u32 [#allocation6], 4
      %s34 = int_to_ptr.vmem [resolvable:$true] %s33
      %36 = dma.hbm_to_vmem [thread:$0]  %s1, 128, %s34, [#allocation7]
    $region9: #{tpu_custom_call.1} parent=1 // pred_fallthru
      _
    // Predicated region
    $region10: #{tpu_custom_call.1} parent=1 // pred_check
      _
    $region11: #{tpu_custom_call.1} parent=1 // pred_check_branch
      %38 = sbr.rel (0) target = $region13
    $region12: #{tpu_custom_call.1} parent=1 // pred_region
      %s40 = ssub.s32 4096, 4096
      %41 = vsyncadd [#allocation7], %s40
      %s42 = sshll.u32 [#allocation8], 4
      %s43 = int_to_ptr.vmem [resolvable:$true] %s42
      %48 = dma.hbm_to_vmem [thread:$0]  %s2, 4096, %s43, [#allocation7], 128, 128, 8
    $region13: #{tpu_custom_call.1} parent=1 // pred_fallthru
      _
    // Predicated region
    $region14: #{tpu_custom_call.1} parent=1 // pred_check
      _
    $region15: #{tpu_custom_call.1} parent=1 // pred_check_branch
      %50 = sbr.rel (0) target = $region17
    $region16: #{tpu_custom_call.1} parent=1 // pred_region
      %s52 = ssub.s32 4096, 4096
      %53 = vsyncadd [#allocation10], %s52
      %s54 = sshll.u32 [#allocation9], 4
      %s55 = int_to_ptr.vmem [resolvable:$true] %s54
      %60 = dma.hbm_to_vmem [thread:$0]  %s3, 4096, %s55, [#allocation10], 128, 128, 8
    $region17: #{tpu_custom_call.1} parent=1 // pred_fallthru
      _
    // Predicated region
    $region18: #{tpu_custom_call.1} parent=1 // pred_check
      _
    $region19: #{tpu_custom_call.1} parent=1 // pred_check_branch
      %62 = sbr.rel (0) target = $region21
    $region20: #{tpu_custom_call.1} parent=1 // pred_region
      _
    $region21: #{tpu_custom_call.1} parent=1 // pred_fallthru
      _
    // Predicated region
    $region22: #{tpu_custom_call.1} parent=1 // pred_check
      _
    $region23: #{tpu_custom_call.1} parent=1 // pred_check_branch
      %64 = sbr.rel (0) target = $region25
    $region24: #{tpu_custom_call.1} parent=1 // pred_region
      _
    $region25: #{tpu_custom_call.1} parent=1 // pred_fallthru
      _
    // Predicated region
    $region26: #{tpu_custom_call.1} parent=1 // pred_check
      _
    $region27: #{tpu_custom_call.1} parent=1 // pred_check_branch
      %66 = sbr.rel (0) target = $region29
    $region28: #{tpu_custom_call.1} parent=1 // pred_region
      _
    $region29: #{tpu_custom_call.1} parent=1 // pred_fallthru
      _
    // Predicated region
    $region30: #{tpu_custom_call.1} parent=1 // pred_check
      _
    $region31: #{tpu_custom_call.1} parent=1 // pred_check_branch
      %68 = sbr.rel (0) target = $region33
    $region32: #{tpu_custom_call.1} parent=1 // pred_region
      %69 = dma.done [#allocation4], 128
    $region33: #{tpu_custom_call.1} parent=1 // pred_fallthru
      _
    // Predicated region
    $region34: #{tpu_custom_call.1} parent=1 // pred_check
      _
    $region35: #{tpu_custom_call.1} parent=1 // pred_check_branch
      %71 = sbr.rel (0) target = $region37
    $region36: #{tpu_custom_call.1} parent=1 // pred_region
      %72 = dma.done [#allocation7], 128
    $region37: #{tpu_custom_call.1} parent=1 // pred_fallthru
      _
    // Predicated region
    $region38: #{tpu_custom_call.1} parent=1 // pred_check
      _
    $region39: #{tpu_custom_call.1} parent=1 // pred_check_branch
      %74 = sbr.rel (0) target = $region41
    $region40: #{tpu_custom_call.1} parent=1 // pred_region
      %75 = dma.done [#allocation7], 4096
    $region41: #{tpu_custom_call.1} parent=1 // pred_fallthru
      _
    // Predicated region
    $region42: #{tpu_custom_call.1} parent=1 // pred_check
      _
    $region43: #{tpu_custom_call.1} parent=1 // pred_check_branch
      %77 = sbr.rel (0) target = $region45
    $region44: #{tpu_custom_call.1} parent=1 // pred_region
      %78 = dma.done [#allocation10], 4096
    $region45: #{tpu_custom_call.1} parent=1 // pred_fallthru
      _
    %v79 = vld [vmem:[#allocation3] sm:$0xff]
    %v80 = vld [vmem:[#allocation8] sm:$0xff]
    %v81 = vld [vmem:[#allocation8 + $0x8] sm:$0xff]
    %v82 = vld [vmem:[#allocation8 + $0x10] sm:$0xff]
    %v83 = vld [vmem:[#allocation8 + $0x18] sm:$0xff]
    %v84 = vld [vmem:[#allocation8 + $0x20] sm:$0xff]
    %v85 = vld [vmem:[#allocation8 + $0x28] sm:$0xff]
    %v86 = vld [vmem:[#allocation8 + $0x30] sm:$0xff]
    %v87 = vld [vmem:[#allocation8 + $0x38] sm:$0xff]
    %v88 = vld [vmem:[#allocation8 + $0x40] sm:$0xff]
    %v89 = vld [vmem:[#allocation8 + $0x48] sm:$0xff]
    %v90 = vld [vmem:[#allocation8 + $0x50] sm:$0xff]
    %v91 = vld [vmem:[#allocation8 + $0x58] sm:$0xff]
    %v92 = vld [vmem:[#allocation8 + $0x60] sm:$0xff]
    %v93 = vld [vmem:[#allocation8 + $0x68] sm:$0xff]
    %v94 = vld [vmem:[#allocation8 + $0x70] sm:$0xff]
    %v95 = vld [vmem:[#allocation8 + $0x78] sm:$0xff]
    %v96 = vld [vmem:[#allocation8 + $0x80] sm:$0xff]
    %v97 = vld [vmem:[#allocation8 + $0x88] sm:$0xff]
    %v98 = vld [vmem:[#allocation8 + $0x90] sm:$0xff]
    %v99 = vld [vmem:[#allocation8 + $0x98] sm:$0xff]
    %v100 = vld [vmem:[#allocation8 + $0xa0] sm:$0xff]
    %v101 = vld [vmem:[#allocation8 + $0xa8] sm:$0xff]
    %v102 = vld [vmem:[#allocation8 + $0xb0] sm:$0xff]
    %v103 = vld [vmem:[#allocation8 + $0xb8] sm:$0xff]
    %v104 = vld [vmem:[#allocation8 + $0xc0] sm:$0xff]
    %v105 = vld [vmem:[#allocation8 + $0xc8] sm:$0xff]
    %v106 = vld [vmem:[#allocation8 + $0xd0] sm:$0xff]
    %v107 = vld [vmem:[#allocation8 + $0xd8] sm:$0xff]
    %v108 = vld [vmem:[#allocation8 + $0xe0] sm:$0xff]
    %v109 = vld [vmem:[#allocation8 + $0xe8] sm:$0xff]
    %v110 = vld [vmem:[#allocation8 + $0xf0] sm:$0xff]
    %v111 = vld [vmem:[#allocation8 + $0xf8] sm:$0xff]
    %v112 = vld [vmem:[#allocation6] sm:$0xff]
    %v113 = vld [vmem:[#allocation9] sm:$0xff]
    %v114 = vld [vmem:[#allocation9 + $0x8] sm:$0xff]
    %v115 = vld [vmem:[#allocation9 + $0x10] sm:$0xff]
    %v116 = vld [vmem:[#allocation9 + $0x18] sm:$0xff]
    %v117 = vld [vmem:[#allocation9 + $0x20] sm:$0xff]
    %v118 = vld [vmem:[#allocation9 + $0x28] sm:$0xff]
    %v119 = vld [vmem:[#allocation9 + $0x30] sm:$0xff]
    %v120 = vld [vmem:[#allocation9 + $0x38] sm:$0xff]
    %v121 = vld [vmem:[#allocation9 + $0x40] sm:$0xff]
    %v122 = vld [vmem:[#allocation9 + $0x48] sm:$0xff]
    %v123 = vld [vmem:[#allocation9 + $0x50] sm:$0xff]
    %v124 = vld [vmem:[#allocation9 + $0x58] sm:$0xff]
    %v125 = vld [vmem:[#allocation9 + $0x60] sm:$0xff]
    %v126 = vld [vmem:[#allocation9 + $0x68] sm:$0xff]
    %v127 = vld [vmem:[#allocation9 + $0x70] sm:$0xff]
    %v128 = vld [vmem:[#allocation9 + $0x78] sm:$0xff]
    %v129 = vld [vmem:[#allocation9 + $0x80] sm:$0xff]
    %v130 = vld [vmem:[#allocation9 + $0x88] sm:$0xff]
    %v131 = vld [vmem:[#allocation9 + $0x90] sm:$0xff]
    %v132 = vld [vmem:[#allocation9 + $0x98] sm:$0xff]
    %v133 = vld [vmem:[#allocation9 + $0xa0] sm:$0xff]
    %v134 = vld [vmem:[#allocation9 + $0xa8] sm:$0xff]
    %v135 = vld [vmem:[#allocation9 + $0xb0] sm:$0xff]
    %v136 = vld [vmem:[#allocation9 + $0xb8] sm:$0xff]
    %v137 = vld [vmem:[#allocation9 + $0xc0] sm:$0xff]
    %v138 = vld [vmem:[#allocation9 + $0xc8] sm:$0xff]
    %v139 = vld [vmem:[#allocation9 + $0xd0] sm:$0xff]
    %v140 = vld [vmem:[#allocation9 + $0xd8] sm:$0xff]
    %v141 = vld [vmem:[#allocation9 + $0xe0] sm:$0xff]
    %v142 = vld [vmem:[#allocation9 + $0xe8] sm:$0xff]
    %v143 = vld [vmem:[#allocation9 + $0xf0] sm:$0xff]
    %v144 = vld [vmem:[#allocation9 + $0xf8] sm:$0xff]
    %v146 = vunpack.c.l.b16 %v112
    %v147 = vunpack.c.h.b16 %v112
    %v148 = vpack.c.b16 %v146, %v146
    %v149 = vpack.c.b16 %v147, %v147
    %v184 = vunpack.c.l.b16 %v113
    %v185 = vunpack.c.h.b16 %v113
    %v186 = vunpack.c.l.b16 %v114
    %v187 = vunpack.c.h.b16 %v114
    %v188 = vunpack.c.l.b16 %v115
    %v189 = vunpack.c.h.b16 %v115
    %v190 = vunpack.c.l.b16 %v116
    %v191 = vunpack.c.h.b16 %v116
    %v192 = vunpack.c.l.b16 %v117
    %v193 = vunpack.c.h.b16 %v117
    %v194 = vunpack.c.l.b16 %v118
    %v195 = vunpack.c.h.b16 %v118
    %v196 = vunpack.c.l.b16 %v119
    %v197 = vunpack.c.h.b16 %v119
    %v198 = vunpack.c.l.b16 %v120
    %v199 = vunpack.c.h.b16 %v120
    %v200 = vunpack.c.l.b16 %v121
    %v201 = vunpack.c.h.b16 %v121
    %v202 = vunpack.c.l.b16 %v122
    %v203 = vunpack.c.h.b16 %v122
    %v204 = vunpack.c.l.b16 %v123
    %v205 = vunpack.c.h.b16 %v123
    %v206 = vunpack.c.l.b16 %v124
    %v207 = vunpack.c.h.b16 %v124
    %v208 = vunpack.c.l.b16 %v125
    %v209 = vunpack.c.h.b16 %v125
    %v210 = vunpack.c.l.b16 %v126
    %v211 = vunpack.c.h.b16 %v126
    %v212 = vunpack.c.l.b16 %v127
    %v213 = vunpack.c.h.b16 %v127
    %v214 = vunpack.c.l.b16 %v128
    %v215 = vunpack.c.h.b16 %v128
    %v216 = vunpack.c.l.b16 %v129
    %v217 = vunpack.c.h.b16 %v129
    %v218 = vunpack.c.l.b16 %v130
    %v219 = vunpack.c.h.b16 %v130
    %v220 = vunpack.c.l.b16 %v131
    %v221 = vunpack.c.h.b16 %v131
    %v222 = vunpack.c.l.b16 %v132
    %v223 = vunpack.c.h.b16 %v132
    %v224 = vunpack.c.l.b16 %v133
    %v225 = vunpack.c.h.b16 %v133
    %v226 = vunpack.c.l.b16 %v134
    %v227 = vunpack.c.h.b16 %v134
    %v228 = vunpack.c.l.b16 %v135
    %v229 = vunpack.c.h.b16 %v135
    %v230 = vunpack.c.l.b16 %v136
    %v231 = vunpack.c.h.b16 %v136
    %v232 = vunpack.c.l.b16 %v137
    %v233 = vunpack.c.h.b16 %v137
    %v234 = vunpack.c.l.b16 %v138
    %v235 = vunpack.c.h.b16 %v138
    %v236 = vunpack.c.l.b16 %v139
    %v237 = vunpack.c.h.b16 %v139
    %v238 = vunpack.c.l.b16 %v140
    %v239 = vunpack.c.h.b16 %v140
    %v240 = vunpack.c.l.b16 %v141
    %v241 = vunpack.c.h.b16 %v141
    %v242 = vunpack.c.l.b16 %v142
    %v243 = vunpack.c.h.b16 %v142
    %v244 = vunpack.c.l.b16 %v143
    %v245 = vunpack.c.h.b16 %v143
    %v246 = vunpack.c.l.b16 %v144
    %v247 = vunpack.c.h.b16 %v144
    %v248 = vpack.c.b16 %v186, %v184
    %v249 = vpack.c.b16 %v187, %v185
    %v250 = vpack.c.b16 %v190, %v188
    %v251 = vpack.c.b16 %v191, %v189
    %v252 = vpack.c.b16 %v194, %v192
    %v253 = vpack.c.b16 %v195, %v193
    %v254 = vpack.c.b16 %v198, %v196
    %v255 = vpack.c.b16 %v199, %v197
    %v256 = vpack.c.b16 %v202, %v200
    %v257 = vpack.c.b16 %v203, %v201
    %v258 = vpack.c.b16 %v206, %v204
    %v259 = vpack.c.b16 %v207, %v205
    %v260 = vpack.c.b16 %v210, %v208
    %v261 = vpack.c.b16 %v211, %v209
    %v262 = vpack.c.b16 %v214, %v212
    %v263 = vpack.c.b16 %v215, %v213
    %v264 = vpack.c.b16 %v218, %v216
    %v265 = vpack.c.b16 %v219, %v217
    %v266 = vpack.c.b16 %v222, %v220
    %v267 = vpack.c.b16 %v223, %v221
    %v268 = vpack.c.b16 %v226, %v224
    %v269 = vpack.c.b16 %v227, %v225
    %v270 = vpack.c.b16 %v230, %v228
    %v271 = vpack.c.b16 %v231, %v229
    %v272 = vpack.c.b16 %v234, %v232
    %v273 = vpack.c.b16 %v235, %v233
    %v274 = vpack.c.b16 %v238, %v236
    %v275 = vpack.c.b16 %v239, %v237
    %v276 = vpack.c.b16 %v242, %v240
    %v277 = vpack.c.b16 %v243, %v241
    %v278 = vpack.c.b16 %v246, %v244
    %v279 = vpack.c.b16 %v247, %v245
    %312 = vmatprep.subr.bf16.mxu0 %v263
    %313 = vmatpush1.bf16.msra.mxu0 %v262
    %314 = vmatprep.subr.bf16.mxu0 %v261
    %315 = vmatpush1.bf16.msra.mxu0 %v260
    %316 = vmatprep.subr.bf16.mxu0 %v259
    %317 = vmatpush1.bf16.msra.mxu0 %v258
    %318 = vmatprep.subr.bf16.mxu0 %v257
    %319 = vmatpush1.bf16.msra.mxu0 %v256
    %320 = vmatprep.subr.bf16.mxu0 %v255
    %321 = vmatpush1.bf16.msra.mxu0 %v254
    %322 = vmatprep.subr.bf16.mxu0 %v253
    %323 = vmatpush1.bf16.msra.mxu0 %v252
    %324 = vmatprep.subr.bf16.mxu0 %v251
    %325 = vmatpush1.bf16.msra.mxu0 %v250
    %326 = vmatprep.subr.bf16.mxu0 %v249
    %327 = vmatpush1.bf16.msra.mxu0 %v248
    %328 = vmatprep.subr.bf16.mxu0 %v279
    %329 = vmatpush2.bf16.msra.mxu0 %v278
    %330 = vmatprep.subr.bf16.mxu0 %v277
    %331 = vmatpush2.bf16.msra.mxu0 %v276
    %332 = vmatprep.subr.bf16.mxu0 %v275
    %333 = vmatpush2.bf16.msra.mxu0 %v274
    %334 = vmatprep.subr.bf16.mxu0 %v273
    %335 = vmatpush2.bf16.msra.mxu0 %v272
    %336 = vmatprep.subr.bf16.mxu0 %v271
    %337 = vmatpush2.bf16.msra.mxu0 %v270
    %338 = vmatprep.subr.bf16.mxu0 %v269
    %339 = vmatpush2.bf16.msra.mxu0 %v268
    %340 = vmatprep.subr.bf16.mxu0 %v267
    %341 = vmatpush2.bf16.msra.mxu0 %v266
    %342 = vmatprep.subr.bf16.mxu0 %v265
    %343 = vmatpush2.bf16.msra.mxu0 %v264
    %344 = vmatprep.mubr.bf16.mxu0 %v149
    %345 = vmatmul.mubr.bf16.gmra.mxu0 %v148
    %v346 = vpop.f32.mrf.mxu0
    %v347 = vadd.f32 0.0, %v346
    %v348 = vpop.f32.mrf.mxu0
    %v349 = vadd.f32 0.0, %v348
    %v350 = vpop.f32.mrf.mxu0
    %v351 = vpop.f32.mrf.mxu0
    %352 = vdwg.mxu0
    %v354 = vunpack.c.l.b16 %v79
    %v355 = vunpack.c.h.b16 %v79
    %v356 = vpack.c.b16 %v354, %v354
    %v357 = vpack.c.b16 %v355, %v355
    %v392 = vunpack.c.l.b16 %v80
    %v393 = vunpack.c.h.b16 %v80
    %v394 = vunpack.c.l.b16 %v81
    %v395 = vunpack.c.h.b16 %v81
    %v396 = vunpack.c.l.b16 %v82
    %v397 = vunpack.c.h.b16 %v82
    %v398 = vunpack.c.l.b16 %v83
    %v399 = vunpack.c.h.b16 %v83
    %v400 = vunpack.c.l.b16 %v84
    %v401 = vunpack.c.h.b16 %v84
    %v402 = vunpack.c.l.b16 %v85
    %v403 = vunpack.c.h.b16 %v85
    %v404 = vunpack.c.l.b16 %v86
    %v405 = vunpack.c.h.b16 %v86
    %v406 = vunpack.c.l.b16 %v87
    %v407 = vunpack.c.h.b16 %v87
    %v408 = vunpack.c.l.b16 %v88
    %v409 = vunpack.c.h.b16 %v88
    %v410 = vunpack.c.l.b16 %v89
    %v411 = vunpack.c.h.b16 %v89
    %v412 = vunpack.c.l.b16 %v90
    %v413 = vunpack.c.h.b16 %v90
    %v414 = vunpack.c.l.b16 %v91
    %v415 = vunpack.c.h.b16 %v91
    %v416 = vunpack.c.l.b16 %v92
    %v417 = vunpack.c.h.b16 %v92
    %v418 = vunpack.c.l.b16 %v93
    %v419 = vunpack.c.h.b16 %v93
    %v420 = vunpack.c.l.b16 %v94
    %v421 = vunpack.c.h.b16 %v94
    %v422 = vunpack.c.l.b16 %v95
    %v423 = vunpack.c.h.b16 %v95
    %v424 = vunpack.c.l.b16 %v96
    %v425 = vunpack.c.h.b16 %v96
    %v426 = vunpack.c.l.b16 %v97
    %v427 = vunpack.c.h.b16 %v97
    %v428 = vunpack.c.l.b16 %v98
    %v429 = vunpack.c.h.b16 %v98
    %v430 = vunpack.c.l.b16 %v99
    %v431 = vunpack.c.h.b16 %v99
    %v432 = vunpack.c.l.b16 %v100
    %v433 = vunpack.c.h.b16 %v100
    %v434 = vunpack.c.l.b16 %v101
    %v435 = vunpack.c.h.b16 %v101
    %v436 = vunpack.c.l.b16 %v102
    %v437 = vunpack.c.h.b16 %v102
    %v438 = vunpack.c.l.b16 %v103
    %v439 = vunpack.c.h.b16 %v103
    %v440 = vunpack.c.l.b16 %v104
    %v441 = vunpack.c.h.b16 %v104
    %v442 = vunpack.c.l.b16 %v105
    %v443 = vunpack.c.h.b16 %v105
    %v444 = vunpack.c.l.b16 %v106
    %v445 = vunpack.c.h.b16 %v106
    %v446 = vunpack.c.l.b16 %v107
    %v447 = vunpack.c.h.b16 %v107
    %v448 = vunpack.c.l.b16 %v108
    %v449 = vunpack.c.h.b16 %v108
    %v450 = vunpack.c.l.b16 %v109
    %v451 = vunpack.c.h.b16 %v109
    %v452 = vunpack.c.l.b16 %v110
    %v453 = vunpack.c.h.b16 %v110
    %v454 = vunpack.c.l.b16 %v111
    %v455 = vunpack.c.h.b16 %v111
    %v456 = vpack.c.b16 %v394, %v392
    %v457 = vpack.c.b16 %v395, %v393
    %v458 = vpack.c.b16 %v398, %v396
    %v459 = vpack.c.b16 %v399, %v397
    %v460 = vpack.c.b16 %v402, %v400
    %v461 = vpack.c.b16 %v403, %v401
    %v462 = vpack.c.b16 %v406, %v404
    %v463 = vpack.c.b16 %v407, %v405
    %v464 = vpack.c.b16 %v410, %v408
    %v465 = vpack.c.b16 %v411, %v409
    %v466 = vpack.c.b16 %v414, %v412
    %v467 = vpack.c.b16 %v415, %v413
    %v468 = vpack.c.b16 %v418, %v416
    %v469 = vpack.c.b16 %v419, %v417
    %v470 = vpack.c.b16 %v422, %v420
    %v471 = vpack.c.b16 %v423, %v421
    %v472 = vpack.c.b16 %v426, %v424
    %v473 = vpack.c.b16 %v427, %v425
    %v474 = vpack.c.b16 %v430, %v428
    %v475 = vpack.c.b16 %v431, %v429
    %v476 = vpack.c.b16 %v434, %v432
    %v477 = vpack.c.b16 %v435, %v433
    %v478 = vpack.c.b16 %v438, %v436
    %v479 = vpack.c.b16 %v439, %v437
    %v480 = vpack.c.b16 %v442, %v440
    %v481 = vpack.c.b16 %v443, %v441
    %v482 = vpack.c.b16 %v446, %v444
    %v483 = vpack.c.b16 %v447, %v445
    %v484 = vpack.c.b16 %v450, %v448
    %v485 = vpack.c.b16 %v451, %v449
    %v486 = vpack.c.b16 %v454, %v452
    %v487 = vpack.c.b16 %v455, %v453
    %520 = vmatprep.subr.bf16.mxu0 %v471
    %521 = vmatpush1.bf16.msra.mxu0 %v470
    %522 = vmatprep.subr.bf16.mxu0 %v469
    %523 = vmatpush1.bf16.msra.mxu0 %v468
    %524 = vmatprep.subr.bf16.mxu0 %v467
    %525 = vmatpush1.bf16.msra.mxu0 %v466
    %526 = vmatprep.subr.bf16.mxu0 %v465
    %527 = vmatpush1.bf16.msra.mxu0 %v464
    %528 = vmatprep.subr.bf16.mxu0 %v463
    %529 = vmatpush1.bf16.msra.mxu0 %v462
    %530 = vmatprep.subr.bf16.mxu0 %v461
    %531 = vmatpush1.bf16.msra.mxu0 %v460
    %532 = vmatprep.subr.bf16.mxu0 %v459
    %533 = vmatpush1.bf16.msra.mxu0 %v458
    %534 = vmatprep.subr.bf16.mxu0 %v457
    %535 = vmatpush1.bf16.msra.mxu0 %v456
    %536 = vmatprep.subr.bf16.mxu0 %v487
    %537 = vmatpush2.bf16.msra.mxu0 %v486
    %538 = vmatprep.subr.bf16.mxu0 %v485
    %539 = vmatpush2.bf16.msra.mxu0 %v484
    %540 = vmatprep.subr.bf16.mxu0 %v483
    %541 = vmatpush2.bf16.msra.mxu0 %v482
    %542 = vmatprep.subr.bf16.mxu0 %v481
    %543 = vmatpush2.bf16.msra.mxu0 %v480
    %544 = vmatprep.subr.bf16.mxu0 %v479
    %545 = vmatpush2.bf16.msra.mxu0 %v478
    %546 = vmatprep.subr.bf16.mxu0 %v477
    %547 = vmatpush2.bf16.msra.mxu0 %v476
    %548 = vmatprep.subr.bf16.mxu0 %v475
    %549 = vmatpush2.bf16.msra.mxu0 %v474
    %550 = vmatprep.subr.bf16.mxu0 %v473
    %551 = vmatpush2.bf16.msra.mxu0 %v472
    %552 = vmatprep.mubr.bf16.mxu0 %v357
    %553 = vmatmul.mubr.bf16.gmra.mxu0 %v356
    %v554 = vpop.f32.mrf.mxu0
    %v555 = vadd.f32 %v347, %v554
    %v556 = vpop.f32.mrf.mxu0
    %v557 = vadd.f32 %v349, %v556
    %v558 = vpop.f32.mrf.mxu0
    %v559 = vpop.f32.mrf.mxu0
    %560 = vdwg.mxu0
    %v561 = vld [vmem:[%s4] sm:$0x3]
    %v563 = vlaneseq
    %v564 = vshrl.u32 %v563, 7
    %v565 = vsub.s32 0, %v564
    %v566 = vrot.slane %v561, %v565
    %v567 = vlaneseq
    %v568 = vshrl.u32 %v567, 7
    %v569 = vsub.s32 1, %v568
    %v570 = vrot.slane %v561, %v569
    %v573 = vadd.f32 %v555, %v566
    %v574 = vadd.f32 %v557, %v570
    %v575 = vmax.f32 %v573, 0.0
    %v576 = vmax.f32 %v574, 0.0
    %v577 = vld [vmem:[%s5] sm:$0x3]
    %v579 = vlaneseq
    %v580 = vshrl.u32 %v579, 7
    %v581 = vsub.s32 0, %v580
    %v582 = vrot.slane %v577, %v581
    %v583 = vlaneseq
    %v584 = vshrl.u32 %v583, 7
    %v585 = vsub.s32 1, %v584
    %v586 = vrot.slane %v577, %v585
    %v589 = vmul.f32 %v575, %v582
    %v590 = vmul.f32 %v576, %v586
    %v591 = vadd.f32 %v589, %v590
    %592 = vadd.xlane.f32.xlu0 %v591
    %v593 = vpop.xlane.xlu0 %592
    %s594 = sld [smem:[#allocation2]]
    %v595 = vstv %s594
    %v596 = vadd.f32 %v593, %v595
    %v597 = vxor.u32 %v596, 2147483648
    %v598 = vmul.f32 %v597, 1.442695
    %v599 = vpow.pop %v598
    %v600 = vadd.f32 %v599, 1.0
    %v601 = vrcp.pop %v600
    %v602 = vmul.f32 1.0, %v601
    %v604 = vlaneseq
    %v605 = vand.u32 %v604, 127
    %v606 = vlaneseq
    %v607 = vshrl.u32 %v606, 7
    %v608 = vsub.s32 %v605, %v607
    %v609 = vrot.slane %v602, %v608
    %vm611 = vcmask 57344
    %612 = vst.msk [vmem:[#allocation11] sm:$0x1] %vm611, %v609
    // Predicated region
    $region46: #{tpu_custom_call.1} parent=1 // pred_check
      _
    $region47: #{tpu_custom_call.1} parent=1 // pred_check_branch
      %614 = sbr.rel (0) target = $region49
    $region48: #{tpu_custom_call.1} parent=1 // pred_region
      %s616 = ssub.s32 16, 16
      %617 = vsyncadd [#allocation5], %s616
      %s619 = sshll.u32 [#allocation11], 4
      %s620 = int_to_ptr.vmem [resolvable:$true] %s619
      %622 = dma.vmem_to_hbm [thread:$0]  %s620, 16, %s7, [#allocation5]
    $region49: #{tpu_custom_call.1} parent=1 // pred_fallthru
      _
    // Predicated region
    $region50: #{tpu_custom_call.1} parent=1 // pred_check
      _
    $region51: #{tpu_custom_call.1} parent=1 // pred_check_branch
      %624 = sbr.rel (0) target = $region53
    $region52: #{tpu_custom_call.1} parent=1 // pred_region
      %625 = dma.done [#allocation5], 16
    $region53: #{tpu_custom_call.1} parent=1 // pred_fallthru
      _
    %626 = vsyncpa [#allocation4], 1
    %627 = vsyncpa [#allocation7], 1
    %628 = vsyncpa [#allocation10], 1
    %629 = vsyncpa [#allocation5], 1

</llo_original>
